<compile_context>
chip_gen: v6e
topology: v6e:2x2x1
jax: 0.10.0
libtpu: 0.0.40
codegen_flags: <defaults>
</compile_context>

<pallas_src>
import functools
import math

import jax
import jax.numpy as jnp
from jax.experimental import pallas as pl
from jax.experimental.pallas import tpu as pltpu

_INV_SQRT2 = 0.7071067811865476


def _erf_f32(z):
    # Abramowitz & Stegun 7.1.26, |abs err| <= 1.5e-7, built only from
    # mul/add/div/exp/where (guaranteed VPU/EUP lowering).  The divide is kept
    # exact (not pl.reciprocal(approx=True)) so GELU stays far inside the
    # 1e-4 parity budget vs torch's exact gelu.
    sgn = jnp.where(z < 0.0, -1.0, 1.0)
    a = jnp.abs(z)
    t = 1.0 / (1.0 + 0.3275911 * a)
    poly = t * (0.254829592
                + t * (-0.284496736
                       + t * (1.421413741
                              + t * (-1.453152027 + t * 1.061405429))))
    return sgn * (1.0 - poly * jnp.exp(-a * a))


def _gelu_exact(h):
    # matches torch.nn.functional.gelu(approximate='none') to ~1e-7 abs error
    return 0.5 * h * (1.0 + _erf_f32(h * _INV_SQRT2))


def _ffn_kernel(x_ref, w1_ref, b1_ref, w2_ref, b2_ref, o_ref, *, seq_len):
    """One grid step: a flattened (rows, Hp) slab holding block_b samples."""
    x = x_ref[...]                      # (rows, Hp) f32
    cdt = w1_ref.dtype                  # matmul operand dtype (f32 or bf16)

    def taps(a):
        # a[l-2] / a[l+2] for every row, with zeros where the dilated tap
        # would cross a sample end (= the conv's zero padding).  The roll uses
        # the XLU slot (free when MXU-bound); the mask kills rows that wrapped
        # across sample boundaries.  No zero-row concatenation, no (M, 3C) copy.
        m, c = a.shape
        pos = jax.lax.broadcasted_iota(jnp.int32, (m, c), 0) % seq_len
        zero = jnp.zeros((), a.dtype)
        a_m2 = jnp.where(pos >= 2, pltpu.roll(a, 2 % m, axis=0), zero)
        a_p2 = jnp.where(pos < seq_len - 2,
                         pltpu.roll(a, (m - 2) % m, axis=0), zero)
        return a_m2, a_p2

    # ---- conv1: three accumulated matmuls (one per dilated tap) ----
    xc = x.astype(cdt)
    xm2, xp2 = taps(xc)
    h = jnp.dot(xm2, w1_ref[0], preferred_element_type=jnp.float32)
    h = h + jnp.dot(xc, w1_ref[1], preferred_element_type=jnp.float32)
    h = h + jnp.dot(xp2, w1_ref[2], preferred_element_type=jnp.float32)
    h = h + b1_ref[...]                 # (1, Fp) broadcast, emitted once
    h = _gelu_exact(h)
    # TODO(synk): nn.Dropout is identity in eval mode; training-mode stochastic
    # dropout is not implemented here.

    # ---- conv2: same structure, pf -> hidden ----
    hc = h.astype(cdt)
    hm2, hp2 = taps(hc)
    y = jnp.dot(hm2, w2_ref[0], preferred_element_type=jnp.float32)
    y = y + jnp.dot(hc, w2_ref[1], preferred_element_type=jnp.float32)
    y = y + jnp.dot(hp2, w2_ref[2], preferred_element_type=jnp.float32)
    y = y + b2_ref[...]
    o_ref[...] = y.astype(o_ref.dtype)


def _round_up(n, m):
    return ((n + m - 1) // m) * m


def _block_vmem_bytes(rows, Hp, Fp, wbytes):
    # double-buffered x/o slabs (f32) + resident tap weights (the pipeliner
    # keeps 2 copies even though their index_map is constant) + the live
    # intermediates (x taps, h and its taps, all f32).
    io = 2 * 2 * rows * Hp * 4
    weights = 2 * (3 * Hp * Fp + 3 * Fp * Hp) * wbytes + 2 * (Fp + Hp) * 4
    inter = rows * (3 * Hp + 4 * Fp) * 4
    return io + weights + inter


def _pick_block_b(B, L, Hp, Fp, wbytes):
    # Target ~1024 matmul rows per grid step (fills the 128/256-row MXU and
    # amortizes the ~0.35us/step overhead) while keeping the per-step VMEM
    # footprint under a cross-generation budget.  block_b must divide B and
    # block_b*L must be sublane (8) aligned unless the block is the full array.
    # TODO(synk): for very long L / large channels, add an L-tiling grid axis
    # with a 2-row halo instead of whole-L slabs (v7x 64 MiB VMEM budget).
    target_rows, budget = 1024, 48 * 2**20
    cands = [bb for bb in range(1, B + 1)
             if B % bb == 0 and ((bb * L) % 8 == 0 or bb == B)]
    fits = [bb for bb in cands
            if _block_vmem_bytes(bb * L, Hp, Fp, wbytes) <= budget]
    small = [bb for bb in fits if bb * L <= target_rows]
    if small:
        return max(small)
    if fits:
        return min(fits)
    return min(cands)


def positionwise_feedforward(x, w1, b1, w2, b2, *, block_b=None,
                             compute_dtype=None):
    """Eval-mode forward of PositionwiseFeedforwardLayer.

    x: (B, L, hidden) channels-last (the PyTorch module transposes to NCL
    internally).  Conv1d parameter layouts: w1: (pf, hidden, 3), b1: (pf,),
    w2: (hidden, pf, 3), b2: (hidden,).  Returns (B, L, hidden).
    compute_dtype=jnp.bfloat16 runs the MXU natively in bf16 (v6e/v7x) with
    f32 accumulation (~1e-3 rel error); the default keeps f32 parity.
    """
    B, L, H = x.shape
    F = w1.shape[0]
    assert w1.shape == (F, H, 3) and w2.shape == (H, F, 3)
    assert b1.shape == (F,) and b2.shape == (H,)

    cdt = jnp.dtype(compute_dtype) if compute_dtype is not None else jnp.dtype(x.dtype)

    # Lane-dense channel padding (avoids masked partial stores / relayouts
    # when hidden or pf is not a multiple of 128; a no-op at production sizes).
    Hp, Fp = _round_up(H, 128), _round_up(F, 128)

    # Tap-major weights: conv_out = x[l-2]@w_t[0] + x[l]@w_t[1] + x[l+2]@w_t[2] + b
    w1t = jnp.pad(jnp.transpose(w1, (2, 1, 0)),
                  ((0, 0), (0, Hp - H), (0, Fp - F))).astype(cdt)   # (3, Hp, Fp)
    w2t = jnp.pad(jnp.transpose(w2, (2, 1, 0)),
                  ((0, 0), (0, Fp - F), (0, Hp - H))).astype(cdt)   # (3, Fp, Hp)
    b1p = jnp.pad(b1, (0, Fp - F)).reshape(1, Fp).astype(jnp.float32)
    b2p = jnp.pad(b2, (0, Hp - H)).reshape(1, Hp).astype(jnp.float32)

    xp = x if Hp == H else jnp.pad(x, ((0, 0), (0, 0), (0, Hp - H)))
    xp = xp.reshape(B * L, Hp)          # flatten batch into the matmul M dim

    wbytes = cdt.itemsize
    if block_b is None:
        block_b = _pick_block_b(B, L, Hp, Fp, wbytes)
    assert B % block_b == 0
    rows = block_b * L
    grid = (B // block_b,)

    est = _block_vmem_bytes(rows, Hp, Fp, wbytes)
    vmem_limit = int(min(96 * 2**20, max(32 * 2**20, 2 * est)))

    io_spec = pl.BlockSpec((rows, Hp), lambda b: (b, 0))
    # Weights/biases: constant index_map -> fetched once, resident across grid.
    # (At very large H/F, single-buffering them via pipeline_mode=pl.Buffered(1)
    # or storing them in bf16 halves the resident footprint.)
    w1_spec = pl.BlockSpec((3, Hp, Fp), lambda b: (0, 0, 0))
    b1_spec = pl.BlockSpec((1, Fp), lambda b: (0, 0))
    w2_spec = pl.BlockSpec((3, Fp, Hp), lambda b: (0, 0, 0))
    b2_spec = pl.BlockSpec((1, Hp), lambda b: (0, 0))

    out = pl.pallas_call(
        functools.partial(_ffn_kernel, seq_len=L),
        out_shape=jax.ShapeDtypeStruct((B * L, Hp), x.dtype),
        grid_spec=pltpu.PrefetchScalarGridSpec(
            num_scalar_prefetch=0,
            grid=grid,
            in_specs=[io_spec, w1_spec, b1_spec, w2_spec, b2_spec],
            out_specs=io_spec,
        ),
        compiler_params=pltpu.CompilerParams(
            dimension_semantics=("parallel",),
            vmem_limit_bytes=vmem_limit),
    )(xp, w1t, b1p, w2t, b2p)

    if Hp != H:
        out = out[:, :H]
    return out.reshape(B, L, H)


def _reference(x, w1, b1, w2, b2):
    # Independent pure-JAX/XLA reference matching the PyTorch forward.
    xt = jnp.transpose(x, (0, 2, 1))                       # (B, H, L)
    dn = ("NCH", "OIH", "NCH")
    h = jax.lax.conv_general_dilated(xt, w1, window_strides=(1,),
                                     padding=[(2, 2)], rhs_dilation=(2,),
                                     dimension_numbers=dn)
    h = jax.nn.gelu(h + b1[None, :, None], approximate=False)
    y = jax.lax.conv_general_dilated(h, w2, window_strides=(1,),
                                     padding=[(2, 2)], rhs_dilation=(2,),
                                     dimension_numbers=dn)
    y = y + b2[None, :, None]
    return jnp.transpose(y, (0, 2, 1))


if __name__ == "__main__":
    key = jax.random.PRNGKey(0)
    k1, k2, k3, k4, k5 = jax.random.split(key, 5)

    B, L, hidden_dim, pf_dim = 2, 8, 32, 64
    x = jax.random.normal(k1, (B, L, hidden_dim), dtype=jnp.float32)

    s1 = 1.0 / math.sqrt(hidden_dim * 3)
    w1 = jax.random.uniform(k2, (pf_dim, hidden_dim, 3),
                            minval=-s1, maxval=s1, dtype=jnp.float32)
    b1 = jax.random.uniform(k3, (pf_dim,), minval=-s1, maxval=s1,
                            dtype=jnp.float32)
    s2 = 1.0 / math.sqrt(pf_dim * 3)
    w2 = jax.random.uniform(k4, (hidden_dim, pf_dim, 3),
                            minval=-s2, maxval=s2, dtype=jnp.float32)
    b2 = jax.random.uniform(k5, (hidden_dim,), minval=-s2, maxval=s2,
                            dtype=jnp.float32)

    out = jax.block_until_ready(positionwise_feedforward(x, w1, b1, w2, b2))
    assert out.shape == (B, L, hidden_dim)

    ref = jax.block_until_ready(_reference(x, w1, b1, w2, b2))
    err = float(jnp.max(jnp.abs(out - ref)))
    assert err < 1e-4, f"max abs err {err}"

    print("KERNEL_OK")
</pallas_src>

<mosaic_0001>
module attributes {stable_mosaic.version = 11 : i64} {
  func.func @_ffn_kernel(%arg0: i32, %arg1: memref<16x128xf32, #tpu.memory_space<vmem>>, %arg2: memref<3x128x128xf32, #tpu.memory_space<vmem>>, %arg3: memref<1x128xf32, #tpu.memory_space<vmem>>, %arg4: memref<3x128x128xf32, #tpu.memory_space<vmem>>, %arg5: memref<1x128xf32, #tpu.memory_space<vmem>>, %arg6: memref<16x128xf32, #tpu.memory_space<vmem>>) attributes {dimension_semantics = [#tpu.dimension_semantics<parallel>], iteration_bounds = array<i64: 1>, scalar_prefetch = 0 : i64, scratch_operands = 0 : i64, tpu.core_type = #tpu.core_type<tc>, window_params = [{transform_indices = @transform_0, window_bounds = array<i64: 16, 128>}, {pipeline_mode = #tpu.pipeline_mode<synchronous>, transform_indices = @transform_1, window_bounds = array<i64: 3, 128, 128>}, {pipeline_mode = #tpu.pipeline_mode<synchronous>, transform_indices = @transform_2, window_bounds = array<i64: 1, 128>}, {pipeline_mode = #tpu.pipeline_mode<synchronous>, transform_indices = @transform_3, window_bounds = array<i64: 3, 128, 128>}, {pipeline_mode = #tpu.pipeline_mode<synchronous>, transform_indices = @transform_4, window_bounds = array<i64: 1, 128>}, {transform_indices = @transform_5, window_bounds = array<i64: 16, 128>}]} {
    %c0 = arith.constant 0 : index
    %c0_0 = arith.constant 0 : index
    %0 = vector.load %arg1[%c0, %c0_0] : memref<16x128xf32, #tpu.memory_space<vmem>>, vector<16x128xf32>
    %1 = tpu.iota {dimensions = array<i32: 0>} : vector<16x128xi32>
    %c8_i32 = arith.constant 8 : i32
    %c0_i32 = arith.constant 0 : i32
    %2 = arith.cmpi eq, %c8_i32, %c0_i32 : i32
    %c1_i32 = arith.constant 1 : i32
    %3 = arith.select %2, %c1_i32, %c8_i32 : i32
    %4 = vector.broadcast %3 : i32 to vector<16x128xi32>
    %5 = arith.remsi %1, %4 : vector<16x128xi32>
    %c0_i32_1 = arith.constant 0 : i32
    %6 = vector.broadcast %c0_i32_1 : i32 to vector<16x128xi32>
    %7 = arith.cmpi ne, %5, %6 : vector<16x128xi32>
    %c0_i32_2 = arith.constant 0 : i32
    %8 = vector.broadcast %c0_i32_2 : i32 to vector<16x128xi32>
    %9 = arith.cmpi slt, %5, %8 : vector<16x128xi32>
    %c0_i32_3 = arith.constant 0 : i32
    %10 = arith.cmpi slt, %3, %c0_i32_3 : i32
    %11 = vector.broadcast %10 : i1 to vector<16x128xi1>
    %12 = vector.broadcast %11 : vector<16x128xi1> to vector<16x128xi1>
    %13 = arith.xori %9, %12 : vector<16x128xi1>
    %14 = arith.andi %13, %7 : vector<16x128xi1>
    %15 = vector.broadcast %3 : i32 to vector<16x128xi32>
    %16 = arith.addi %5, %15 : vector<16x128xi32>
    %17 = arith.select %14, %16, %5 : vector<16x128xi1>, vector<16x128xi32>
    %c2_i32 = arith.constant 2 : i32
    %18 = vector.broadcast %c2_i32 : i32 to vector<16x128xi32>
    %19 = arith.cmpi sge, %17, %18 : vector<16x128xi32>
    %c2_i32_4 = arith.constant 2 : i32
    %20 = tpu.dynamic_rotate %0 by %c2_i32_4 dim 0 : vector<16x128xf32>, i32 -> vector<16x128xf32>
    %cst = arith.constant 0.000000e+00 : f32
    %21 = vector.broadcast %cst : f32 to vector<16x128xf32>
    %22 = arith.select %19, %20, %21 : vector<16x128xi1>, vector<16x128xf32>
    %c6_i32 = arith.constant 6 : i32
    %23 = vector.broadcast %c6_i32 : i32 to vector<16x128xi32>
    %24 = arith.cmpi slt, %17, %23 : vector<16x128xi32>
    %c14_i32 = arith.constant 14 : i32
    %25 = tpu.dynamic_rotate %0 by %c14_i32 dim 0 : vector<16x128xf32>, i32 -> vector<16x128xf32>
    %cst_5 = arith.constant 0.000000e+00 : f32
    %26 = vector.broadcast %cst_5 : f32 to vector<16x128xf32>
    %27 = arith.select %24, %25, %26 : vector<16x128xi1>, vector<16x128xf32>
    %c0_6 = arith.constant 0 : index
    %c0_7 = arith.constant 0 : index
    %c0_8 = arith.constant 0 : index
    %28 = vector.load %arg2[%c0_6, %c0_7, %c0_8] : memref<3x128x128xf32, #tpu.memory_space<vmem>>, vector<1x128x128xf32>
    %29 = vector.shape_cast %28 : vector<1x128x128xf32> to vector<128x128xf32>
    %cst_9 = arith.constant dense<0.000000e+00> : vector<16x128xf32>
    %30 = tpu.matmul %22, %29, %cst_9 {dimension_numbers = #tpu.dot_dimension_numbers<[1], [0], [0], [1], [0, 0, 1, 1], [], []>} : vector<16x128xf32>, vector<128x128xf32>, vector<16x128xf32> -> vector<16x128xf32>
    %c1 = arith.constant 1 : index
    %c0_10 = arith.constant 0 : index
    %c0_11 = arith.constant 0 : index
    %31 = vector.load %arg2[%c1, %c0_10, %c0_11] : memref<3x128x128xf32, #tpu.memory_space<vmem>>, vector<1x128x128xf32>
    %32 = vector.shape_cast %31 : vector<1x128x128xf32> to vector<128x128xf32>
    %cst_12 = arith.constant dense<0.000000e+00> : vector<16x128xf32>
    %33 = tpu.matmul %0, %32, %cst_12 {dimension_numbers = #tpu.dot_dimension_numbers<[1], [0], [0], [1], [0, 0, 1, 1], [], []>} : vector<16x128xf32>, vector<128x128xf32>, vector<16x128xf32> -> vector<16x128xf32>
    %34 = arith.addf %30, %33 : vector<16x128xf32>
    %c2 = arith.constant 2 : index
    %c0_13 = arith.constant 0 : index
    %c0_14 = arith.constant 0 : index
    %35 = vector.load %arg2[%c2, %c0_13, %c0_14] : memref<3x128x128xf32, #tpu.memory_space<vmem>>, vector<1x128x128xf32>
    %36 = vector.shape_cast %35 : vector<1x128x128xf32> to vector<128x128xf32>
    %cst_15 = arith.constant dense<0.000000e+00> : vector<16x128xf32>
    %37 = tpu.matmul %27, %36, %cst_15 {dimension_numbers = #tpu.dot_dimension_numbers<[1], [0], [0], [1], [0, 0, 1, 1], [], []>} : vector<16x128xf32>, vector<128x128xf32>, vector<16x128xf32> -> vector<16x128xf32>
    %38 = arith.addf %34, %37 : vector<16x128xf32>
    %c0_16 = arith.constant 0 : index
    %c0_17 = arith.constant 0 : index
    %39 = vector.load %arg3[%c0_16, %c0_17] : memref<1x128xf32, #tpu.memory_space<vmem>>, vector<1x128xf32>
    %40 = vector.broadcast %39 : vector<1x128xf32> to vector<16x128xf32>
    %41 = arith.addf %38, %40 : vector<16x128xf32>
    %cst_18 = arith.constant 5.000000e-01 : f32
    %42 = vector.broadcast %cst_18 : f32 to vector<16x128xf32>
    %43 = arith.mulf %42, %41 : vector<16x128xf32>
    %cst_19 = arith.constant 0.707106769 : f32
    %44 = vector.broadcast %cst_19 : f32 to vector<16x128xf32>
    %45 = arith.mulf %41, %44 : vector<16x128xf32>
    %cst_20 = arith.constant 0.000000e+00 : f32
    %46 = vector.broadcast %cst_20 : f32 to vector<16x128xf32>
    %47 = arith.cmpf olt, %45, %46 : vector<16x128xf32>
    %cst_21 = arith.constant -1.000000e+00 : f32
    %cst_22 = arith.constant 1.000000e+00 : f32
    %48 = vector.broadcast %cst_21 : f32 to vector<16x128xf32>
    %49 = vector.broadcast %cst_22 : f32 to vector<16x128xf32>
    %50 = arith.select %47, %48, %49 : vector<16x128xi1>, vector<16x128xf32>
    %51 = math.absf %45 : vector<16x128xf32>
    %cst_23 = arith.constant 0.327591091 : f32
    %52 = vector.broadcast %cst_23 : f32 to vector<16x128xf32>
    %53 = arith.mulf %52, %51 : vector<16x128xf32>
    %cst_24 = arith.constant 1.000000e+00 : f32
    %54 = vector.broadcast %cst_24 : f32 to vector<16x128xf32>
    %55 = arith.addf %54, %53 : vector<16x128xf32>
    %cst_25 = arith.constant 1.000000e+00 : f32
    %56 = vector.broadcast %cst_25 : f32 to vector<16x128xf32>
    %57 = arith.divf %56, %55 : vector<16x128xf32>
    %cst_26 = arith.constant 1.06140542 : f32
    %58 = vector.broadcast %cst_26 : f32 to vector<16x128xf32>
    %59 = arith.mulf %57, %58 : vector<16x128xf32>
    %cst_27 = arith.constant -1.45315206 : f32
    %60 = vector.broadcast %cst_27 : f32 to vector<16x128xf32>
    %61 = arith.addf %60, %59 : vector<16x128xf32>
    %62 = arith.mulf %57, %61 : vector<16x128xf32>
    %cst_28 = arith.constant 1.42141378 : f32
    %63 = vector.broadcast %cst_28 : f32 to vector<16x128xf32>
    %64 = arith.addf %63, %62 : vector<16x128xf32>
    %65 = arith.mulf %57, %64 : vector<16x128xf32>
    %cst_29 = arith.constant -0.284496725 : f32
    %66 = vector.broadcast %cst_29 : f32 to vector<16x128xf32>
    %67 = arith.addf %66, %65 : vector<16x128xf32>
    %68 = arith.mulf %57, %67 : vector<16x128xf32>
    %cst_30 = arith.constant 0.254829586 : f32
    %69 = vector.broadcast %cst_30 : f32 to vector<16x128xf32>
    %70 = arith.addf %69, %68 : vector<16x128xf32>
    %71 = arith.mulf %57, %70 : vector<16x128xf32>
    %cst_31 = arith.constant 0.000000e+00 : f32
    %72 = vector.broadcast %cst_31 : f32 to vector<16x128xf32>
    %73 = arith.subf %72, %51 : vector<16x128xf32>
    %74 = arith.mulf %73, %51 : vector<16x128xf32>
    %75 = math.exp %74 : vector<16x128xf32>
    %76 = arith.mulf %71, %75 : vector<16x128xf32>
    %cst_32 = arith.constant 1.000000e+00 : f32
    %77 = vector.broadcast %cst_32 : f32 to vector<16x128xf32>
    %78 = arith.subf %77, %76 : vector<16x128xf32>
    %79 = arith.mulf %50, %78 : vector<16x128xf32>
    %cst_33 = arith.constant 1.000000e+00 : f32
    %80 = vector.broadcast %cst_33 : f32 to vector<16x128xf32>
    %81 = arith.addf %80, %79 : vector<16x128xf32>
    %82 = arith.mulf %43, %81 : vector<16x128xf32>
    %83 = tpu.iota {dimensions = array<i32: 0>} : vector<16x128xi32>
    %c8_i32_34 = arith.constant 8 : i32
    %c0_i32_35 = arith.constant 0 : i32
    %84 = arith.cmpi eq, %c8_i32_34, %c0_i32_35 : i32
    %c1_i32_36 = arith.constant 1 : i32
    %85 = arith.select %84, %c1_i32_36, %c8_i32_34 : i32
    %86 = vector.broadcast %85 : i32 to vector<16x128xi32>
    %87 = arith.remsi %83, %86 : vector<16x128xi32>
    %c0_i32_37 = arith.constant 0 : i32
    %88 = vector.broadcast %c0_i32_37 : i32 to vector<16x128xi32>
    %89 = arith.cmpi ne, %87, %88 : vector<16x128xi32>
    %c0_i32_38 = arith.constant 0 : i32
    %90 = vector.broadcast %c0_i32_38 : i32 to vector<16x128xi32>
    %91 = arith.cmpi slt, %87, %90 : vector<16x128xi32>
    %c0_i32_39 = arith.constant 0 : i32
    %92 = arith.cmpi slt, %85, %c0_i32_39 : i32
    %93 = vector.broadcast %92 : i1 to vector<16x128xi1>
    %94 = vector.broadcast %93 : vector<16x128xi1> to vector<16x128xi1>
    %95 = arith.xori %91, %94 : vector<16x128xi1>
    %96 = arith.andi %95, %89 : vector<16x128xi1>
    %97 = vector.broadcast %85 : i32 to vector<16x128xi32>
    %98 = arith.addi %87, %97 : vector<16x128xi32>
    %99 = arith.select %96, %98, %87 : vector<16x128xi1>, vector<16x128xi32>
    %c2_i32_40 = arith.constant 2 : i32
    %100 = vector.broadcast %c2_i32_40 : i32 to vector<16x128xi32>
    %101 = arith.cmpi sge, %99, %100 : vector<16x128xi32>
    %c2_i32_41 = arith.constant 2 : i32
    %102 = tpu.dynamic_rotate %82 by %c2_i32_41 dim 0 : vector<16x128xf32>, i32 -> vector<16x128xf32>
    %cst_42 = arith.constant 0.000000e+00 : f32
    %103 = vector.broadcast %cst_42 : f32 to vector<16x128xf32>
    %104 = arith.select %101, %102, %103 : vector<16x128xi1>, vector<16x128xf32>
    %c6_i32_43 = arith.constant 6 : i32
    %105 = vector.broadcast %c6_i32_43 : i32 to vector<16x128xi32>
    %106 = arith.cmpi slt, %99, %105 : vector<16x128xi32>
    %c14_i32_44 = arith.constant 14 : i32
    %107 = tpu.dynamic_rotate %82 by %c14_i32_44 dim 0 : vector<16x128xf32>, i32 -> vector<16x128xf32>
    %cst_45 = arith.constant 0.000000e+00 : f32
    %108 = vector.broadcast %cst_45 : f32 to vector<16x128xf32>
    %109 = arith.select %106, %107, %108 : vector<16x128xi1>, vector<16x128xf32>
    %c0_46 = arith.constant 0 : index
    %c0_47 = arith.constant 0 : index
    %c0_48 = arith.constant 0 : index
    %110 = vector.load %arg4[%c0_46, %c0_47, %c0_48] : memref<3x128x128xf32, #tpu.memory_space<vmem>>, vector<1x128x128xf32>
    %111 = vector.shape_cast %110 : vector<1x128x128xf32> to vector<128x128xf32>
    %cst_49 = arith.constant dense<0.000000e+00> : vector<16x128xf32>
    %112 = tpu.matmul %104, %111, %cst_49 {dimension_numbers = #tpu.dot_dimension_numbers<[1], [0], [0], [1], [0, 0, 1, 1], [], []>} : vector<16x128xf32>, vector<128x128xf32>, vector<16x128xf32> -> vector<16x128xf32>
    %c1_50 = arith.constant 1 : index
    %c0_51 = arith.constant 0 : index
    %c0_52 = arith.constant 0 : index
    %113 = vector.load %arg4[%c1_50, %c0_51, %c0_52] : memref<3x128x128xf32, #tpu.memory_space<vmem>>, vector<1x128x128xf32>
    %114 = vector.shape_cast %113 : vector<1x128x128xf32> to vector<128x128xf32>
    %cst_53 = arith.constant dense<0.000000e+00> : vector<16x128xf32>
    %115 = tpu.matmul %82, %114, %cst_53 {dimension_numbers = #tpu.dot_dimension_numbers<[1], [0], [0], [1], [0, 0, 1, 1], [], []>} : vector<16x128xf32>, vector<128x128xf32>, vector<16x128xf32> -> vector<16x128xf32>
    %116 = arith.addf %112, %115 : vector<16x128xf32>
    %c2_54 = arith.constant 2 : index
    %c0_55 = arith.constant 0 : index
    %c0_56 = arith.constant 0 : index
    %117 = vector.load %arg4[%c2_54, %c0_55, %c0_56] : memref<3x128x128xf32, #tpu.memory_space<vmem>>, vector<1x128x128xf32>
    %118 = vector.shape_cast %117 : vector<1x128x128xf32> to vector<128x128xf32>
    %cst_57 = arith.constant dense<0.000000e+00> : vector<16x128xf32>
    %119 = tpu.matmul %109, %118, %cst_57 {dimension_numbers = #tpu.dot_dimension_numbers<[1], [0], [0], [1], [0, 0, 1, 1], [], []>} : vector<16x128xf32>, vector<128x128xf32>, vector<16x128xf32> -> vector<16x128xf32>
    %120 = arith.addf %116, %119 : vector<16x128xf32>
    %c0_58 = arith.constant 0 : index
    %c0_59 = arith.constant 0 : index
    %121 = vector.load %arg5[%c0_58, %c0_59] : memref<1x128xf32, #tpu.memory_space<vmem>>, vector<1x128xf32>
    %122 = vector.broadcast %121 : vector<1x128xf32> to vector<16x128xf32>
    %123 = arith.addf %120, %122 : vector<16x128xf32>
    %c0_60 = arith.constant 0 : index
    %c0_61 = arith.constant 0 : index
    %124 = vector.load %arg6[%c0_60, %c0_61] : memref<16x128xf32, #tpu.memory_space<vmem>>, vector<16x128xf32>
    tpu.vector_store %arg6[%c0_60, %c0_61], %123 {strides = array<i32>} : memref<16x128xf32, #tpu.memory_space<vmem>>, vector<16x128xf32>,
    return
  }
  func.func @transform_0(%arg0: i32) -> (i32, i32) {
    %c0_i32 = arith.constant 0 : i32
    %c0_i32_0 = arith.constant 0 : i32
    return %arg0, %c0_i32 : i32, i32
  }
  func.func @transform_1(%arg0: i32) -> (i32, i32, i32) {
    %c0_i32 = arith.constant 0 : i32
    %c0_i32_0 = arith.constant 0 : i32
    %c0_i32_1 = arith.constant 0 : i32
    %c0_i32_2 = arith.constant 0 : i32
    return %c0_i32, %c0_i32_0, %c0_i32_1 : i32, i32, i32
  }
  func.func @transform_2(%arg0: i32) -> (i32, i32) {
    %c0_i32 = arith.constant 0 : i32
    %c0_i32_0 = arith.constant 0 : i32
    %c0_i32_1 = arith.constant 0 : i32
    return %c0_i32, %c0_i32_0 : i32, i32
  }
  func.func @transform_3(%arg0: i32) -> (i32, i32, i32) {
    %c0_i32 = arith.constant 0 : i32
    %c0_i32_0 = arith.constant 0 : i32
    %c0_i32_1 = arith.constant 0 : i32
    %c0_i32_2 = arith.constant 0 : i32
    return %c0_i32, %c0_i32_0, %c0_i32_1 : i32, i32, i32
  }
  func.func @transform_4(%arg0: i32) -> (i32, i32) {
    %c0_i32 = arith.constant 0 : i32
    %c0_i32_0 = arith.constant 0 : i32
    %c0_i32_1 = arith.constant 0 : i32
    return %c0_i32, %c0_i32_0 : i32, i32
  }
  func.func @transform_5(%arg0: i32) -> (i32, i32) {
    %c0_i32 = arith.constant 0 : i32
    %c0_i32_0 = arith.constant 0 : i32
    return %arg0, %c0_i32 : i32, i32
  }
}

</mosaic_0001>

<llo_original>
// kernel: tpu_custom_call.1
$region0: #{tpu_custom_call.1}
  #allocation0 [shape = 'u32[]', space=smem, size = 0x4, offset = 0x4, fixed_abs, tag = 'smem constant byte address 0x4 - core index']
  #allocation1 [shape = 'u32[144,128]{1,0:T(1,128)}', space=vmem, size = 0x12000, scoped, tag = 'internal scratch']
  %s0 = inlined_call_operand.hbm [shape: f32[16,128], index: 0, kind: input, shape index: {}]
  %s1 = inlined_call_operand.hbm [shape: f32[3,128,128], index: 1, kind: input, shape index: {}]
  %s2 = inlined_call_operand.vmem [shape: f32[1,128], index: 2, kind: input, shape index: {}]
  %s3 = inlined_call_operand.hbm [shape: f32[3,128,128], index: 3, kind: input, shape index: {}]
  %s4 = inlined_call_operand.vmem [shape: f32[1,128], index: 4, kind: input, shape index: {}]
  %s5 = inlined_call_operand.hbm [shape: f32[16,128], index: 5, kind: output, shape index: {}]
  %s6 = sld [smem:[#allocation0]]
  $region42: #{tpu_custom_call.1} parent=0
    _
  %s8 = ssub.s32 1, %s6
  %s9 = scalar_select 0, %s8, %s6
  $region1: #{tpu_custom_call.1} parent=0
    #allocation2 [shape = 'u8[8192]{0}', space=vmem, size = 0x2000, scoped, tag = 'input window, operand 0, single buffered']
    #allocation3 [shape = 's32[1]{0}', space=sflag, size = 0x4, scoped, tag = 'scoped memory for tpu_custom_call.1']
    #allocation4 [shape = 's32[1]{0}', space=sflag, size = 0x4, scoped, tag = 'scoped memory for tpu_custom_call.1']
    #allocation5 [shape = 'u8[196608]{0}', space=vmem, size = 0x30000, scoped, tag = 'input window, operand 1, single buffered']
    #allocation6 [shape = 's32[1]{0}', space=sflag, size = 0x4, scoped, tag = 'scoped memory for tpu_custom_call.1']
    #allocation7 [shape = 'u8[196608]{0}', space=vmem, size = 0x30000, scoped, tag = 'input window, operand 3, single buffered']
    #allocation8 [shape = 'u8[8192]{0}', space=vmem, size = 0x2000, scoped, tag = 'output window, operand 0, single buffered']
    %10 = vsyncpa [#allocation3], 0
    %11 = vsyncpa [#allocation6], 0
    %12 = vsyncpa [#allocation4], 0
    // Predicated region
    $region2: #{tpu_custom_call.1} parent=1 // pred_check
      _
    $region3: #{tpu_custom_call.1} parent=1 // pred_check_branch
      %14 = sbr.rel (0) target = $region5
    $region4: #{tpu_custom_call.1} parent=1 // pred_region
      %s16 = ssub.s32 256, 256
      %17 = vsyncadd [#allocation3], %s16
      %s18 = sshll.u32 [#allocation2], 4
      %s19 = int_to_ptr.vmem [resolvable:$true] %s18
      %24 = dma.hbm_to_vmem [thread:$0]  %s0, 256, %s19, [#allocation3], 128, 128, 8
    $region5: #{tpu_custom_call.1} parent=1 // pred_fallthru
      _
    // Predicated region
    $region6: #{tpu_custom_call.1} parent=1 // pred_check
      _
    $region7: #{tpu_custom_call.1} parent=1 // pred_check_branch
      %26 = sbr.rel (0) target = $region9
    $region8: #{tpu_custom_call.1} parent=1 // pred_region
      %s28 = ssub.s32 6144, 6144
      %29 = vsyncadd [#allocation6], %s28
      %s30 = sshll.u32 [#allocation5], 4
      %s31 = int_to_ptr.vmem [resolvable:$true] %s30
      %36 = dma.hbm_to_vmem [thread:$0]  %s1, 6144, %s31, [#allocation6], 128, 128, 8
    $region9: #{tpu_custom_call.1} parent=1 // pred_fallthru
      _
    // Predicated region
    $region10: #{tpu_custom_call.1} parent=1 // pred_check
      _
    $region11: #{tpu_custom_call.1} parent=1 // pred_check_branch
      %38 = sbr.rel (0) target = $region13
    $region12: #{tpu_custom_call.1} parent=1 // pred_region
      _
    $region13: #{tpu_custom_call.1} parent=1 // pred_fallthru
      _
    // Predicated region
    $region14: #{tpu_custom_call.1} parent=1 // pred_check
      _
    $region15: #{tpu_custom_call.1} parent=1 // pred_check_branch
      %40 = sbr.rel (0) target = $region17
    $region16: #{tpu_custom_call.1} parent=1 // pred_region
      %s42 = ssub.s32 6144, 6144
      %43 = vsyncadd [#allocation6], %s42
      %s44 = sshll.u32 [#allocation7], 4
      %s45 = int_to_ptr.vmem [resolvable:$true] %s44
      %50 = dma.hbm_to_vmem [thread:$0]  %s3, 6144, %s45, [#allocation6], 128, 128, 8
    $region17: #{tpu_custom_call.1} parent=1 // pred_fallthru
      _
    // Predicated region
    $region18: #{tpu_custom_call.1} parent=1 // pred_check
      _
    $region19: #{tpu_custom_call.1} parent=1 // pred_check_branch
      %52 = sbr.rel (0) target = $region21
    $region20: #{tpu_custom_call.1} parent=1 // pred_region
      _
    $region21: #{tpu_custom_call.1} parent=1 // pred_fallthru
      _
    // Predicated region
    $region22: #{tpu_custom_call.1} parent=1 // pred_check
      _
    $region23: #{tpu_custom_call.1} parent=1 // pred_check_branch
      %54 = sbr.rel (0) target = $region25
    $region24: #{tpu_custom_call.1} parent=1 // pred_region
      %55 = dma.done [#allocation3], 256
    $region25: #{tpu_custom_call.1} parent=1 // pred_fallthru
      _
    // Predicated region
    $region26: #{tpu_custom_call.1} parent=1 // pred_check
      _
    $region27: #{tpu_custom_call.1} parent=1 // pred_check_branch
      %57 = sbr.rel (0) target = $region29
    $region28: #{tpu_custom_call.1} parent=1 // pred_region
      %58 = dma.done [#allocation6], 6144
    $region29: #{tpu_custom_call.1} parent=1 // pred_fallthru
      _
    // Predicated region
    $region30: #{tpu_custom_call.1} parent=1 // pred_check
      _
    $region31: #{tpu_custom_call.1} parent=1 // pred_check_branch
      %60 = sbr.rel (0) target = $region33
    $region32: #{tpu_custom_call.1} parent=1 // pred_region
      %61 = dma.done [#allocation6], 6144
    $region33: #{tpu_custom_call.1} parent=1 // pred_fallthru
      _
    %v62 = vld [vmem:[#allocation2] sm:$0xff]
    %v63 = vld [vmem:[#allocation2 + $0x8] sm:$0xff]
    %v64 = vlaneseq
    %v65 = vshrl.u32 %v64, 7
    %v66 = vadd.s32 %v65, 8
    %vm67 = vcmp.lt.s32.totalorder %v65, 0
    %v68 = vsub.s32 0, %v65
    %v69 = vsel %vm67, %v68, %v65
    %v70 = vshrl.u32 %v69, 3
    %v71 = vand.u32 %v69, 7
    %v72 = vsub.s32 0, %v71
    %v73 = vsel %vm67, %v72, %v71
    %vm74 = vcmp.lt.s32.totalorder %v66, 0
    %v75 = vsub.s32 0, %v66
    %v76 = vsel %vm74, %v75, %v66
    %v77 = vshrl.u32 %v76, 3
    %v78 = vand.u32 %v76, 7
    %v79 = vsub.s32 0, %v78
    %v80 = vsel %vm74, %v79, %v78
    %vm81 = vcmp.ne.s32.totalorder %v73, 0
    %vm82 = vcmp.ne.s32.totalorder %v80, 0
    %vm83 = vcmp.lt.s32.totalorder %v73, 0
    %vm84 = vcmp.lt.s32.totalorder %v80, 0
    %vm85 = vmand %vm83, %vm81
    %vm86 = vmand %vm84, %vm82
    %v87 = vadd.s32 %v73, 8
    %v88 = vadd.s32 %v80, 8
    %v89 = vsel %vm85, %v87, %v73
    %v90 = vsel %vm86, %v88, %v80
    %vm91 = vcmp.ge.s32.totalorder %v89, 2
    %vm92 = vcmp.ge.s32.totalorder %v90, 2
    %v93 = vrot.slane %v62, 6
    %v94 = vrot.slane %v63, 6
    %vm95 = vcmp.lt.s32.totalorder %v65, 2
    %v96 = vsel %vm95, %v93, %v94
    %v97 = vsel %vm95, %v94, %v93
    %v98 = vsel %vm91, %v97, 0.0
    %v99 = vsel %vm92, %v96, 0.0
    %vm100 = vcmp.lt.s32.totalorder %v89, 6
    %vm101 = vcmp.lt.s32.totalorder %v90, 6
    %v102 = vrot.slane %v62, 2
    %v103 = vrot.slane %v63, 2
    %vm104 = vcmp.lt.s32.totalorder %v65, 6
    %v105 = vsel %vm104, %v102, %v103
    %v106 = vsel %vm104, %v103, %v102
    %v107 = vsel %vm100, %v105, 0.0
    %v108 = vsel %vm101, %v106, 0.0
    %v109 = vld [vmem:[#allocation5] sm:$0xff]
    %v110 = vld [vmem:[#allocation5 + $0x8] sm:$0xff]
    %v111 = vld [vmem:[#allocation5 + $0x10] sm:$0xff]
    %v112 = vld [vmem:[#allocation5 + $0x18] sm:$0xff]
    %v113 = vld [vmem:[#allocation5 + $0x20] sm:$0xff]
    %v114 = vld [vmem:[#allocation5 + $0x28] sm:$0xff]
    %v115 = vld [vmem:[#allocation5 + $0x30] sm:$0xff]
    %v116 = vld [vmem:[#allocation5 + $0x38] sm:$0xff]
    %v117 = vld [vmem:[#allocation5 + $0x40] sm:$0xff]
    %v118 = vld [vmem:[#allocation5 + $0x48] sm:$0xff]
    %v119 = vld [vmem:[#allocation5 + $0x50] sm:$0xff]
    %v120 = vld [vmem:[#allocation5 + $0x58] sm:$0xff]
    %v121 = vld [vmem:[#allocation5 + $0x60] sm:$0xff]
    %v122 = vld [vmem:[#allocation5 + $0x68] sm:$0xff]
    %v123 = vld [vmem:[#allocation5 + $0x70] sm:$0xff]
    %v124 = vld [vmem:[#allocation5 + $0x78] sm:$0xff]
    %s125 = scalar_lea.vmem [#allocation5], 128
    %v126 = vld [vmem:[%s125] sm:$0xff]
    %v127 = vld [vmem:[%s125 + $0x8] sm:$0xff]
    %v128 = vld [vmem:[%s125 + $0x10] sm:$0xff]
    %v129 = vld [vmem:[%s125 + $0x18] sm:$0xff]
    %v130 = vld [vmem:[%s125 + $0x20] sm:$0xff]
    %v131 = vld [vmem:[%s125 + $0x28] sm:$0xff]
    %v132 = vld [vmem:[%s125 + $0x30] sm:$0xff]
    %v133 = vld [vmem:[%s125 + $0x38] sm:$0xff]
    %v134 = vld [vmem:[%s125 + $0x40] sm:$0xff]
    %v135 = vld [vmem:[%s125 + $0x48] sm:$0xff]
    %v136 = vld [vmem:[%s125 + $0x50] sm:$0xff]
    %v137 = vld [vmem:[%s125 + $0x58] sm:$0xff]
    %v138 = vld [vmem:[%s125 + $0x60] sm:$0xff]
    %v139 = vld [vmem:[%s125 + $0x68] sm:$0xff]
    %v140 = vld [vmem:[%s125 + $0x70] sm:$0xff]
    %v141 = vld [vmem:[%s125 + $0x78] sm:$0xff]
    %142 = vmatprep.subr.mxu0 0.0
    %143 = vmatpush1.msra.mxu0 %v141
    %144 = vmatprep.subr.mxu0 0.0
    %145 = vmatpush1.msra.mxu0 %v140
    %146 = vmatprep.subr.mxu0 0.0
    %147 = vmatpush1.msra.mxu0 %v139
    %148 = vmatprep.subr.mxu0 0.0
    %149 = vmatpush1.msra.mxu0 %v138
    %150 = vmatprep.subr.mxu0 0.0
    %151 = vmatpush1.msra.mxu0 %v137
    %152 = vmatprep.subr.mxu0 0.0
    %153 = vmatpush1.msra.mxu0 %v136
    %154 = vmatprep.subr.mxu0 0.0
    %155 = vmatpush1.msra.mxu0 %v135
    %156 = vmatprep.subr.mxu0 0.0
    %157 = vmatpush1.msra.mxu0 %v134
    %158 = vmatprep.subr.mxu0 0.0
    %159 = vmatpush1.msra.mxu0 %v133
    %160 = vmatprep.subr.mxu0 0.0
    %161 = vmatpush1.msra.mxu0 %v132
    %162 = vmatprep.subr.mxu0 0.0
    %163 = vmatpush1.msra.mxu0 %v131
    %164 = vmatprep.subr.mxu0 0.0
    %165 = vmatpush1.msra.mxu0 %v130
    %166 = vmatprep.subr.mxu0 0.0
    %167 = vmatpush1.msra.mxu0 %v129
    %168 = vmatprep.subr.mxu0 0.0
    %169 = vmatpush1.msra.mxu0 %v128
    %170 = vmatprep.subr.mxu0 0.0
    %171 = vmatpush1.msra.mxu0 %v127
    %172 = vmatprep.subr.mxu0 0.0
    %173 = vmatpush1.msra.mxu0 %v126
    %174 = vmatprep.subr.mxu0 0.0
    %175 = vmatpush2.msra.mxu0 0.0
    %176 = vmatprep.subr.mxu0 0.0
    %177 = vmatpush2.msra.mxu0 0.0
    %178 = vmatprep.subr.mxu0 0.0
    %179 = vmatpush2.msra.mxu0 0.0
    %180 = vmatprep.subr.mxu0 0.0
    %181 = vmatpush2.msra.mxu0 0.0
    %182 = vmatprep.subr.mxu0 0.0
    %183 = vmatpush2.msra.mxu0 0.0
    %184 = vmatprep.subr.mxu0 0.0
    %185 = vmatpush2.msra.mxu0 0.0
    %186 = vmatprep.subr.mxu0 0.0
    %187 = vmatpush2.msra.mxu0 0.0
    %188 = vmatprep.subr.mxu0 0.0
    %189 = vmatpush2.msra.mxu0 0.0
    %190 = vmatprep.subr.mxu0 0.0
    %191 = vmatpush2.msra.mxu0 0.0
    %192 = vmatprep.subr.mxu0 0.0
    %193 = vmatpush2.msra.mxu0 0.0
    %194 = vmatprep.subr.mxu0 0.0
    %195 = vmatpush2.msra.mxu0 0.0
    %196 = vmatprep.subr.mxu0 0.0
    %197 = vmatpush2.msra.mxu0 0.0
    %198 = vmatprep.subr.mxu0 0.0
    %199 = vmatpush2.msra.mxu0 0.0
    %200 = vmatprep.subr.mxu0 0.0
    %201 = vmatpush2.msra.mxu0 0.0
    %202 = vmatprep.subr.mxu0 0.0
    %203 = vmatpush2.msra.mxu0 0.0
    %204 = vmatprep.subr.mxu0 0.0
    %205 = vmatpush2.msra.mxu0 0.0
    %206 = vmatprep.mubr.f32.mxu0 0.0
    %207 = vmatmul.mubr.f32.gmra.mxu0 %v62
    %v208 = vpop.f32.mrf.mxu0
    %v209 = vadd.f32 0.0, %v208
    %v210 = vpop.f32.mrf.mxu0
    %211 = vmatprep.mubr.f32.mxu0 0.0
    %212 = vmatmul.mubr.f32.gmra.mxu0 %v63
    %v213 = vpop.f32.mrf.mxu0
    %v214 = vadd.f32 0.0, %v213
    %v215 = vpop.f32.mrf.mxu0
    %216 = vdwg.mxu0
    %217 = vmatprep.subr.mxu0 0.0
    %218 = vmatpush1.msra.mxu0 %v124
    %219 = vmatprep.subr.mxu0 0.0
    %220 = vmatpush1.msra.mxu0 %v123
    %221 = vmatprep.subr.mxu0 0.0
    %222 = vmatpush1.msra.mxu0 %v122
    %223 = vmatprep.subr.mxu0 0.0
    %224 = vmatpush1.msra.mxu0 %v121
    %225 = vmatprep.subr.mxu0 0.0
    %226 = vmatpush1.msra.mxu0 %v120
    %227 = vmatprep.subr.mxu0 0.0
    %228 = vmatpush1.msra.mxu0 %v119
    %229 = vmatprep.subr.mxu0 0.0
    %230 = vmatpush1.msra.mxu0 %v118
    %231 = vmatprep.subr.mxu0 0.0
    %232 = vmatpush1.msra.mxu0 %v117
    %233 = vmatprep.subr.mxu0 0.0
    %234 = vmatpush1.msra.mxu0 %v116
    %235 = vmatprep.subr.mxu0 0.0
    %236 = vmatpush1.msra.mxu0 %v115
    %237 = vmatprep.subr.mxu0 0.0
    %238 = vmatpush1.msra.mxu0 %v114
    %239 = vmatprep.subr.mxu0 0.0
    %240 = vmatpush1.msra.mxu0 %v113
    %241 = vmatprep.subr.mxu0 0.0
    %242 = vmatpush1.msra.mxu0 %v112
    %243 = vmatprep.subr.mxu0 0.0
    %244 = vmatpush1.msra.mxu0 %v111
    %245 = vmatprep.subr.mxu0 0.0
    %246 = vmatpush1.msra.mxu0 %v110
    %247 = vmatprep.subr.mxu0 0.0
    %248 = vmatpush1.msra.mxu0 %v109
    %249 = vmatprep.subr.mxu0 0.0
    %250 = vmatpush2.msra.mxu0 0.0
    %251 = vmatprep.subr.mxu0 0.0
    %252 = vmatpush2.msra.mxu0 0.0
    %253 = vmatprep.subr.mxu0 0.0
    %254 = vmatpush2.msra.mxu0 0.0
    %255 = vmatprep.subr.mxu0 0.0
    %256 = vmatpush2.msra.mxu0 0.0
    %257 = vmatprep.subr.mxu0 0.0
    %258 = vmatpush2.msra.mxu0 0.0
    %259 = vmatprep.subr.mxu0 0.0
    %260 = vmatpush2.msra.mxu0 0.0
    %261 = vmatprep.subr.mxu0 0.0
    %262 = vmatpush2.msra.mxu0 0.0
    %263 = vmatprep.subr.mxu0 0.0
    %264 = vmatpush2.msra.mxu0 0.0
    %265 = vmatprep.subr.mxu0 0.0
    %266 = vmatpush2.msra.mxu0 0.0
    %267 = vmatprep.subr.mxu0 0.0
    %268 = vmatpush2.msra.mxu0 0.0
    %269 = vmatprep.subr.mxu0 0.0
    %270 = vmatpush2.msra.mxu0 0.0
    %271 = vmatprep.subr.mxu0 0.0
    %272 = vmatpush2.msra.mxu0 0.0
    %273 = vmatprep.subr.mxu0 0.0
    %274 = vmatpush2.msra.mxu0 0.0
    %275 = vmatprep.subr.mxu0 0.0
    %276 = vmatpush2.msra.mxu0 0.0
    %277 = vmatprep.subr.mxu0 0.0
    %278 = vmatpush2.msra.mxu0 0.0
    %279 = vmatprep.subr.mxu0 0.0
    %280 = vmatpush2.msra.mxu0 0.0
    %281 = vmatprep.mubr.f32.mxu0 0.0
    %282 = vmatmul.mubr.f32.gmra.mxu0 %v98
    %v283 = vpop.f32.mrf.mxu0
    %v284 = vadd.f32 %v209, %v283
    %v285 = vpop.f32.mrf.mxu0
    %286 = vmatprep.mubr.f32.mxu0 0.0
    %287 = vmatmul.mubr.f32.gmra.mxu0 %v99
    %v288 = vpop.f32.mrf.mxu0
    %v289 = vadd.f32 %v214, %v288
    %v290 = vpop.f32.mrf.mxu0
    %291 = vdwg.mxu0
    %s292 = scalar_lea.vmem [#allocation5], 256
    %v293 = vld [vmem:[%s292] sm:$0xff]
    %v294 = vld [vmem:[%s292 + $0x8] sm:$0xff]
    %v295 = vld [vmem:[%s292 + $0x10] sm:$0xff]
    %v296 = vld [vmem:[%s292 + $0x18] sm:$0xff]
    %v297 = vld [vmem:[%s292 + $0x20] sm:$0xff]
    %v298 = vld [vmem:[%s292 + $0x28] sm:$0xff]
    %v299 = vld [vmem:[%s292 + $0x30] sm:$0xff]
    %v300 = vld [vmem:[%s292 + $0x38] sm:$0xff]
    %v301 = vld [vmem:[%s292 + $0x40] sm:$0xff]
    %v302 = vld [vmem:[%s292 + $0x48] sm:$0xff]
    %v303 = vld [vmem:[%s292 + $0x50] sm:$0xff]
    %v304 = vld [vmem:[%s292 + $0x58] sm:$0xff]
    %v305 = vld [vmem:[%s292 + $0x60] sm:$0xff]
    %v306 = vld [vmem:[%s292 + $0x68] sm:$0xff]
    %v307 = vld [vmem:[%s292 + $0x70] sm:$0xff]
    %v308 = vld [vmem:[%s292 + $0x78] sm:$0xff]
    %309 = vmatprep.subr.mxu0 0.0
    %310 = vmatpush1.msra.mxu0 %v308
    %311 = vmatprep.subr.mxu0 0.0
    %312 = vmatpush1.msra.mxu0 %v307
    %313 = vmatprep.subr.mxu0 0.0
    %314 = vmatpush1.msra.mxu0 %v306
    %315 = vmatprep.subr.mxu0 0.0
    %316 = vmatpush1.msra.mxu0 %v305
    %317 = vmatprep.subr.mxu0 0.0
    %318 = vmatpush1.msra.mxu0 %v304
    %319 = vmatprep.subr.mxu0 0.0
    %320 = vmatpush1.msra.mxu0 %v303
    %321 = vmatprep.subr.mxu0 0.0
    %322 = vmatpush1.msra.mxu0 %v302
    %323 = vmatprep.subr.mxu0 0.0
    %324 = vmatpush1.msra.mxu0 %v301
    %325 = vmatprep.subr.mxu0 0.0
    %326 = vmatpush1.msra.mxu0 %v300
    %327 = vmatprep.subr.mxu0 0.0
    %328 = vmatpush1.msra.mxu0 %v299
    %329 = vmatprep.subr.mxu0 0.0
    %330 = vmatpush1.msra.mxu0 %v298
    %331 = vmatprep.subr.mxu0 0.0
    %332 = vmatpush1.msra.mxu0 %v297
    %333 = vmatprep.subr.mxu0 0.0
    %334 = vmatpush1.msra.mxu0 %v296
    %335 = vmatprep.subr.mxu0 0.0
    %336 = vmatpush1.msra.mxu0 %v295
    %337 = vmatprep.subr.mxu0 0.0
    %338 = vmatpush1.msra.mxu0 %v294
    %339 = vmatprep.subr.mxu0 0.0
    %340 = vmatpush1.msra.mxu0 %v293
    %341 = vmatprep.subr.mxu0 0.0
    %342 = vmatpush2.msra.mxu0 0.0
    %343 = vmatprep.subr.mxu0 0.0
    %344 = vmatpush2.msra.mxu0 0.0
    %345 = vmatprep.subr.mxu0 0.0
    %346 = vmatpush2.msra.mxu0 0.0
    %347 = vmatprep.subr.mxu0 0.0
    %348 = vmatpush2.msra.mxu0 0.0
    %349 = vmatprep.subr.mxu0 0.0
    %350 = vmatpush2.msra.mxu0 0.0
    %351 = vmatprep.subr.mxu0 0.0
    %352 = vmatpush2.msra.mxu0 0.0
    %353 = vmatprep.subr.mxu0 0.0
    %354 = vmatpush2.msra.mxu0 0.0
    %355 = vmatprep.subr.mxu0 0.0
    %356 = vmatpush2.msra.mxu0 0.0
    %357 = vmatprep.subr.mxu0 0.0
    %358 = vmatpush2.msra.mxu0 0.0
    %359 = vmatprep.subr.mxu0 0.0
    %360 = vmatpush2.msra.mxu0 0.0
    %361 = vmatprep.subr.mxu0 0.0
    %362 = vmatpush2.msra.mxu0 0.0
    %363 = vmatprep.subr.mxu0 0.0
    %364 = vmatpush2.msra.mxu0 0.0
    %365 = vmatprep.subr.mxu0 0.0
    %366 = vmatpush2.msra.mxu0 0.0
    %367 = vmatprep.subr.mxu0 0.0
    %368 = vmatpush2.msra.mxu0 0.0
    %369 = vmatprep.subr.mxu0 0.0
    %370 = vmatpush2.msra.mxu0 0.0
    %371 = vmatprep.subr.mxu0 0.0
    %372 = vmatpush2.msra.mxu0 0.0
    %373 = vmatprep.mubr.f32.mxu0 0.0
    %374 = vmatmul.mubr.f32.gmra.mxu0 %v107
    %v375 = vpop.f32.mrf.mxu0
    %v376 = vadd.f32 0.0, %v375
    %v377 = vpop.f32.mrf.mxu0
    %378 = vmatprep.mubr.f32.mxu0 0.0
    %379 = vmatmul.mubr.f32.gmra.mxu0 %v108
    %v380 = vpop.f32.mrf.mxu0
    %v381 = vadd.f32 0.0, %v380
    %v382 = vpop.f32.mrf.mxu0
    %383 = vdwg.mxu0
    %v384 = vadd.f32 %v284, %v376
    %v385 = vadd.f32 %v289, %v381
    %v386 = vld [vmem:[%s2] sm:$0x1]
    %v388 = vlaneseq
    %v389 = vshrl.u32 %v388, 7
    %v390 = vsub.s32 0, %v389
    %v391 = vrot.slane %v386, %v390
    %v393 = vadd.f32 %v384, %v391
    %v394 = vadd.f32 %v385, %v391
    %v395 = vmul.f32 %v393, 0.5
    %v396 = vmul.f32 %v394, 0.5
    %v397 = vmul.f32 %v393, 0.70710677
    %v398 = vmul.f32 %v394, 0.70710677
    %vm399 = vcmp.lt.f32.partialorder %v397, 0.0
    %vm400 = vcmp.lt.f32.partialorder %v398, 0.0
    %v401 = vsel %vm399, -1.0, 1.0
    %v402 = vsel %vm400, -1.0, 1.0
    %v403 = vand.u32 2147483647, %v397
    %v404 = vand.u32 2147483647, %v398
    %v405 = vmul.f32 %v403, 0.3275911
    %v406 = vmul.f32 %v404, 0.3275911
    %v407 = vadd.f32 %v405, 1.0
    %v408 = vadd.f32 %v406, 1.0
    %v409 = vrcp.pop %v407
    %v410 = vmul.f32 1.0, %v409
    %v411 = vrcp.pop %v408
    %v412 = vmul.f32 1.0, %v411
    %v413 = vmul.f32 %v410, 1.0614054
    %v414 = vmul.f32 %v412, 1.0614054
    %v415 = vadd.f32 %v413, -1.4531521
    %v416 = vadd.f32 %v414, -1.4531521
    %v417 = vmul.f32 %v410, %v415
    %v418 = vmul.f32 %v412, %v416
    %v419 = vadd.f32 %v417, 1.4214138
    %v420 = vadd.f32 %v418, 1.4214138
    %v421 = vmul.f32 %v410, %v419
    %v422 = vmul.f32 %v412, %v420
    %v423 = vadd.f32 %v421, -0.28449672
    %v424 = vadd.f32 %v422, -0.28449672
    %v425 = vmul.f32 %v410, %v423
    %v426 = vmul.f32 %v412, %v424
    %v427 = vadd.f32 %v425, 0.2548296
    %v428 = vadd.f32 %v426, 0.2548296
    %v429 = vmul.f32 %v410, %v427
    %v430 = vmul.f32 %v412, %v428
    %v431 = vsub.f32 0.0, %v403
    %v432 = vsub.f32 0.0, %v404
    %v433 = vmul.f32 %v431, %v403
    %v434 = vmul.f32 %v432, %v404
    %v435 = vmul.f32 %v433, 1.442695
    %v436 = vpow.pop %v435
    %v437 = vmul.f32 %v434, 1.442695
    %v438 = vpow.pop %v437
    %v439 = vmul.f32 %v429, %v436
    %v440 = vmul.f32 %v430, %v438
    %v441 = vsub.f32 1.0, %v439
    %v442 = vsub.f32 1.0, %v440
    %v443 = vmul.f32 %v401, %v441
    %v444 = vmul.f32 %v402, %v442
    %v445 = vadd.f32 %v443, 1.0
    %v446 = vadd.f32 %v444, 1.0
    %v447 = vmul.f32 %v395, %v445
    %v448 = vmul.f32 %v396, %v446
    %v449 = vrot.slane %v447, 6
    %v450 = vrot.slane %v448, 6
    %v451 = vsel %vm95, %v449, %v450
    %v452 = vsel %vm95, %v450, %v449
    %v453 = vsel %vm91, %v452, 0.0
    %v454 = vsel %vm92, %v451, 0.0
    %v455 = vrot.slane %v447, 2
    %v456 = vrot.slane %v448, 2
    %v457 = vsel %vm104, %v455, %v456
    %v458 = vsel %vm104, %v456, %v455
    %v459 = vsel %vm100, %v457, 0.0
    %v460 = vsel %vm101, %v458, 0.0
    %v461 = vld [vmem:[#allocation7] sm:$0xff]
    %v462 = vld [vmem:[#allocation7 + $0x8] sm:$0xff]
    %v463 = vld [vmem:[#allocation7 + $0x10] sm:$0xff]
    %v464 = vld [vmem:[#allocation7 + $0x18] sm:$0xff]
    %v465 = vld [vmem:[#allocation7 + $0x20] sm:$0xff]
    %v466 = vld [vmem:[#allocation7 + $0x28] sm:$0xff]
    %v467 = vld [vmem:[#allocation7 + $0x30] sm:$0xff]
    %v468 = vld [vmem:[#allocation7 + $0x38] sm:$0xff]
    %v469 = vld [vmem:[#allocation7 + $0x40] sm:$0xff]
    %v470 = vld [vmem:[#allocation7 + $0x48] sm:$0xff]
    %v471 = vld [vmem:[#allocation7 + $0x50] sm:$0xff]
    %v472 = vld [vmem:[#allocation7 + $0x58] sm:$0xff]
    %v473 = vld [vmem:[#allocation7 + $0x60] sm:$0xff]
    %v474 = vld [vmem:[#allocation7 + $0x68] sm:$0xff]
    %v475 = vld [vmem:[#allocation7 + $0x70] sm:$0xff]
    %v476 = vld [vmem:[#allocation7 + $0x78] sm:$0xff]
    %s477 = scalar_lea.vmem [#allocation7], 128
    %v478 = vld [vmem:[%s477] sm:$0xff]
    %v479 = vld [vmem:[%s477 + $0x8] sm:$0xff]
    %v480 = vld [vmem:[%s477 + $0x10] sm:$0xff]
    %v481 = vld [vmem:[%s477 + $0x18] sm:$0xff]
    %v482 = vld [vmem:[%s477 + $0x20] sm:$0xff]
    %v483 = vld [vmem:[%s477 + $0x28] sm:$0xff]
    %v484 = vld [vmem:[%s477 + $0x30] sm:$0xff]
    %v485 = vld [vmem:[%s477 + $0x38] sm:$0xff]
    %v486 = vld [vmem:[%s477 + $0x40] sm:$0xff]
    %v487 = vld [vmem:[%s477 + $0x48] sm:$0xff]
    %v488 = vld [vmem:[%s477 + $0x50] sm:$0xff]
    %v489 = vld [vmem:[%s477 + $0x58] sm:$0xff]
    %v490 = vld [vmem:[%s477 + $0x60] sm:$0xff]
    %v491 = vld [vmem:[%s477 + $0x68] sm:$0xff]
    %v492 = vld [vmem:[%s477 + $0x70] sm:$0xff]
    %v493 = vld [vmem:[%s477 + $0x78] sm:$0xff]
    %494 = vmatprep.subr.mxu0 0.0
    %495 = vmatpush1.msra.mxu0 %v493
    %496 = vmatprep.subr.mxu0 0.0
    %497 = vmatpush1.msra.mxu0 %v492
    %498 = vmatprep.subr.mxu0 0.0
    %499 = vmatpush1.msra.mxu0 %v491
    %500 = vmatprep.subr.mxu0 0.0
    %501 = vmatpush1.msra.mxu0 %v490
    %502 = vmatprep.subr.mxu0 0.0
    %503 = vmatpush1.msra.mxu0 %v489
    %504 = vmatprep.subr.mxu0 0.0
    %505 = vmatpush1.msra.mxu0 %v488
    %506 = vmatprep.subr.mxu0 0.0
    %507 = vmatpush1.msra.mxu0 %v487
    %508 = vmatprep.subr.mxu0 0.0
    %509 = vmatpush1.msra.mxu0 %v486
    %510 = vmatprep.subr.mxu0 0.0
    %511 = vmatpush1.msra.mxu0 %v485
    %512 = vmatprep.subr.mxu0 0.0
    %513 = vmatpush1.msra.mxu0 %v484
    %514 = vmatprep.subr.mxu0 0.0
    %515 = vmatpush1.msra.mxu0 %v483
    %516 = vmatprep.subr.mxu0 0.0
    %517 = vmatpush1.msra.mxu0 %v482
    %518 = vmatprep.subr.mxu0 0.0
    %519 = vmatpush1.msra.mxu0 %v481
    %520 = vmatprep.subr.mxu0 0.0
    %521 = vmatpush1.msra.mxu0 %v480
    %522 = vmatprep.subr.mxu0 0.0
    %523 = vmatpush1.msra.mxu0 %v479
    %524 = vmatprep.subr.mxu0 0.0
    %525 = vmatpush1.msra.mxu0 %v478
    %526 = vmatprep.subr.mxu0 0.0
    %527 = vmatpush2.msra.mxu0 0.0
    %528 = vmatprep.subr.mxu0 0.0
    %529 = vmatpush2.msra.mxu0 0.0
    %530 = vmatprep.subr.mxu0 0.0
    %531 = vmatpush2.msra.mxu0 0.0
    %532 = vmatprep.subr.mxu0 0.0
    %533 = vmatpush2.msra.mxu0 0.0
    %534 = vmatprep.subr.mxu0 0.0
    %535 = vmatpush2.msra.mxu0 0.0
    %536 = vmatprep.subr.mxu0 0.0
    %537 = vmatpush2.msra.mxu0 0.0
    %538 = vmatprep.subr.mxu0 0.0
    %539 = vmatpush2.msra.mxu0 0.0
    %540 = vmatprep.subr.mxu0 0.0
    %541 = vmatpush2.msra.mxu0 0.0
    %542 = vmatprep.subr.mxu0 0.0
    %543 = vmatpush2.msra.mxu0 0.0
    %544 = vmatprep.subr.mxu0 0.0
    %545 = vmatpush2.msra.mxu0 0.0
    %546 = vmatprep.subr.mxu0 0.0
    %547 = vmatpush2.msra.mxu0 0.0
    %548 = vmatprep.subr.mxu0 0.0
    %549 = vmatpush2.msra.mxu0 0.0
    %550 = vmatprep.subr.mxu0 0.0
    %551 = vmatpush2.msra.mxu0 0.0
    %552 = vmatprep.subr.mxu0 0.0
    %553 = vmatpush2.msra.mxu0 0.0
    %554 = vmatprep.subr.mxu0 0.0
    %555 = vmatpush2.msra.mxu0 0.0
    %556 = vmatprep.subr.mxu0 0.0
    %557 = vmatpush2.msra.mxu0 0.0
    %558 = vmatprep.mubr.f32.mxu0 0.0
    %559 = vmatmul.mubr.f32.gmra.mxu0 %v447
    %v560 = vpop.f32.mrf.mxu0
    %v561 = vadd.f32 0.0, %v560
    %v562 = vpop.f32.mrf.mxu0
    %563 = vmatprep.mubr.f32.mxu0 0.0
    %564 = vmatmul.mubr.f32.gmra.mxu0 %v448
    %v565 = vpop.f32.mrf.mxu0
    %v566 = vadd.f32 0.0, %v565
    %v567 = vpop.f32.mrf.mxu0
    %568 = vdwg.mxu0
    %569 = vmatprep.subr.mxu0 0.0
    %570 = vmatpush1.msra.mxu0 %v476
    %571 = vmatprep.subr.mxu0 0.0
    %572 = vmatpush1.msra.mxu0 %v475
    %573 = vmatprep.subr.mxu0 0.0
    %574 = vmatpush1.msra.mxu0 %v474
    %575 = vmatprep.subr.mxu0 0.0
    %576 = vmatpush1.msra.mxu0 %v473
    %577 = vmatprep.subr.mxu0 0.0
    %578 = vmatpush1.msra.mxu0 %v472
    %579 = vmatprep.subr.mxu0 0.0
    %580 = vmatpush1.msra.mxu0 %v471
    %581 = vmatprep.subr.mxu0 0.0
    %582 = vmatpush1.msra.mxu0 %v470
    %583 = vmatprep.subr.mxu0 0.0
    %584 = vmatpush1.msra.mxu0 %v469
    %585 = vmatprep.subr.mxu0 0.0
    %586 = vmatpush1.msra.mxu0 %v468
    %587 = vmatprep.subr.mxu0 0.0
    %588 = vmatpush1.msra.mxu0 %v467
    %589 = vmatprep.subr.mxu0 0.0
    %590 = vmatpush1.msra.mxu0 %v466
    %591 = vmatprep.subr.mxu0 0.0
    %592 = vmatpush1.msra.mxu0 %v465
    %593 = vmatprep.subr.mxu0 0.0
    %594 = vmatpush1.msra.mxu0 %v464
    %595 = vmatprep.subr.mxu0 0.0
    %596 = vmatpush1.msra.mxu0 %v463
    %597 = vmatprep.subr.mxu0 0.0
    %598 = vmatpush1.msra.mxu0 %v462
    %599 = vmatprep.subr.mxu0 0.0
    %600 = vmatpush1.msra.mxu0 %v461
    %601 = vmatprep.subr.mxu0 0.0
    %602 = vmatpush2.msra.mxu0 0.0
    %603 = vmatprep.subr.mxu0 0.0
    %604 = vmatpush2.msra.mxu0 0.0
    %605 = vmatprep.subr.mxu0 0.0
    %606 = vmatpush2.msra.mxu0 0.0
    %607 = vmatprep.subr.mxu0 0.0
    %608 = vmatpush2.msra.mxu0 0.0
    %609 = vmatprep.subr.mxu0 0.0
    %610 = vmatpush2.msra.mxu0 0.0
    %611 = vmatprep.subr.mxu0 0.0
    %612 = vmatpush2.msra.mxu0 0.0
    %613 = vmatprep.subr.mxu0 0.0
    %614 = vmatpush2.msra.mxu0 0.0
    %615 = vmatprep.subr.mxu0 0.0
    %616 = vmatpush2.msra.mxu0 0.0
    %617 = vmatprep.subr.mxu0 0.0
    %618 = vmatpush2.msra.mxu0 0.0
    %619 = vmatprep.subr.mxu0 0.0
    %620 = vmatpush2.msra.mxu0 0.0
    %621 = vmatprep.subr.mxu0 0.0
    %622 = vmatpush2.msra.mxu0 0.0
    %623 = vmatprep.subr.mxu0 0.0
    %624 = vmatpush2.msra.mxu0 0.0
    %625 = vmatprep.subr.mxu0 0.0
    %626 = vmatpush2.msra.mxu0 0.0
    %627 = vmatprep.subr.mxu0 0.0
    %628 = vmatpush2.msra.mxu0 0.0
    %629 = vmatprep.subr.mxu0 0.0
    %630 = vmatpush2.msra.mxu0 0.0
    %631 = vmatprep.subr.mxu0 0.0
    %632 = vmatpush2.msra.mxu0 0.0
    %633 = vmatprep.mubr.f32.mxu0 0.0
    %634 = vmatmul.mubr.f32.gmra.mxu0 %v453
    %v635 = vpop.f32.mrf.mxu0
    %v636 = vadd.f32 %v561, %v635
    %v637 = vpop.f32.mrf.mxu0
    %638 = vmatprep.mubr.f32.mxu0 0.0
    %639 = vmatmul.mubr.f32.gmra.mxu0 %v454
    %v640 = vpop.f32.mrf.mxu0
    %v641 = vadd.f32 %v566, %v640
    %v642 = vpop.f32.mrf.mxu0
    %643 = vdwg.mxu0
    %s644 = scalar_lea.vmem [#allocation7], 256
    %v645 = vld [vmem:[%s644] sm:$0xff]
    %v646 = vld [vmem:[%s644 + $0x8] sm:$0xff]
    %v647 = vld [vmem:[%s644 + $0x10] sm:$0xff]
    %v648 = vld [vmem:[%s644 + $0x18] sm:$0xff]
    %v649 = vld [vmem:[%s644 + $0x20] sm:$0xff]
    %v650 = vld [vmem:[%s644 + $0x28] sm:$0xff]
    %v651 = vld [vmem:[%s644 + $0x30] sm:$0xff]
    %v652 = vld [vmem:[%s644 + $0x38] sm:$0xff]
    %v653 = vld [vmem:[%s644 + $0x40] sm:$0xff]
    %v654 = vld [vmem:[%s644 + $0x48] sm:$0xff]
    %v655 = vld [vmem:[%s644 + $0x50] sm:$0xff]
    %v656 = vld [vmem:[%s644 + $0x58] sm:$0xff]
    %v657 = vld [vmem:[%s644 + $0x60] sm:$0xff]
    %v658 = vld [vmem:[%s644 + $0x68] sm:$0xff]
    %v659 = vld [vmem:[%s644 + $0x70] sm:$0xff]
    %v660 = vld [vmem:[%s644 + $0x78] sm:$0xff]
    %661 = vmatprep.subr.mxu0 0.0
    %662 = vmatpush1.msra.mxu0 %v660
    %663 = vmatprep.subr.mxu0 0.0
    %664 = vmatpush1.msra.mxu0 %v659
    %665 = vmatprep.subr.mxu0 0.0
    %666 = vmatpush1.msra.mxu0 %v658
    %667 = vmatprep.subr.mxu0 0.0
    %668 = vmatpush1.msra.mxu0 %v657
    %669 = vmatprep.subr.mxu0 0.0
    %670 = vmatpush1.msra.mxu0 %v656
    %671 = vmatprep.subr.mxu0 0.0
    %672 = vmatpush1.msra.mxu0 %v655
    %673 = vmatprep.subr.mxu0 0.0
    %674 = vmatpush1.msra.mxu0 %v654
    %675 = vmatprep.subr.mxu0 0.0
    %676 = vmatpush1.msra.mxu0 %v653
    %677 = vmatprep.subr.mxu0 0.0
    %678 = vmatpush1.msra.mxu0 %v652
    %679 = vmatprep.subr.mxu0 0.0
    %680 = vmatpush1.msra.mxu0 %v651
    %681 = vmatprep.subr.mxu0 0.0
    %682 = vmatpush1.msra.mxu0 %v650
    %683 = vmatprep.subr.mxu0 0.0
    %684 = vmatpush1.msra.mxu0 %v649
    %685 = vmatprep.subr.mxu0 0.0
    %686 = vmatpush1.msra.mxu0 %v648
    %687 = vmatprep.subr.mxu0 0.0
    %688 = vmatpush1.msra.mxu0 %v647
    %689 = vmatprep.subr.mxu0 0.0
    %690 = vmatpush1.msra.mxu0 %v646
    %691 = vmatprep.subr.mxu0 0.0
    %692 = vmatpush1.msra.mxu0 %v645
    %693 = vmatprep.subr.mxu0 0.0
    %694 = vmatpush2.msra.mxu0 0.0
    %695 = vmatprep.subr.mxu0 0.0
    %696 = vmatpush2.msra.mxu0 0.0
    %697 = vmatprep.subr.mxu0 0.0
    %698 = vmatpush2.msra.mxu0 0.0
    %699 = vmatprep.subr.mxu0 0.0
    %700 = vmatpush2.msra.mxu0 0.0
    %701 = vmatprep.subr.mxu0 0.0
    %702 = vmatpush2.msra.mxu0 0.0
    %703 = vmatprep.subr.mxu0 0.0
    %704 = vmatpush2.msra.mxu0 0.0
    %705 = vmatprep.subr.mxu0 0.0
    %706 = vmatpush2.msra.mxu0 0.0
    %707 = vmatprep.subr.mxu0 0.0
    %708 = vmatpush2.msra.mxu0 0.0
    %709 = vmatprep.subr.mxu0 0.0
    %710 = vmatpush2.msra.mxu0 0.0
    %711 = vmatprep.subr.mxu0 0.0
    %712 = vmatpush2.msra.mxu0 0.0
    %713 = vmatprep.subr.mxu0 0.0
    %714 = vmatpush2.msra.mxu0 0.0
    %715 = vmatprep.subr.mxu0 0.0
    %716 = vmatpush2.msra.mxu0 0.0
    %717 = vmatprep.subr.mxu0 0.0
    %718 = vmatpush2.msra.mxu0 0.0
    %719 = vmatprep.subr.mxu0 0.0
    %720 = vmatpush2.msra.mxu0 0.0
    %721 = vmatprep.subr.mxu0 0.0
    %722 = vmatpush2.msra.mxu0 0.0
    %723 = vmatprep.subr.mxu0 0.0
    %724 = vmatpush2.msra.mxu0 0.0
    %725 = vmatprep.mubr.f32.mxu0 0.0
    %726 = vmatmul.mubr.f32.gmra.mxu0 %v459
    %v727 = vpop.f32.mrf.mxu0
    %v728 = vadd.f32 0.0, %v727
    %v729 = vpop.f32.mrf.mxu0
    %730 = vmatprep.mubr.f32.mxu0 0.0
    %731 = vmatmul.mubr.f32.gmra.mxu0 %v460
    %v732 = vpop.f32.mrf.mxu0
    %v733 = vadd.f32 0.0, %v732
    %v734 = vpop.f32.mrf.mxu0
    %735 = vdwg.mxu0
    %v736 = vadd.f32 %v636, %v728
    %v737 = vadd.f32 %v641, %v733
    %v738 = vld [vmem:[%s4] sm:$0x1]
    %v740 = vlaneseq
    %v741 = vshrl.u32 %v740, 7
    %v742 = vsub.s32 0, %v741
    %v743 = vrot.slane %v738, %v742
    %v745 = vadd.f32 %v736, %v743
    %v746 = vadd.f32 %v737, %v743
    %747 = vst [vmem:[#allocation8] sm:$0xff] %v745
    %748 = vst [vmem:[#allocation8 + $0x8] sm:$0xff] %v746
    // Predicated region
    $region34: #{tpu_custom_call.1} parent=1 // pred_check
      _
    $region35: #{tpu_custom_call.1} parent=1 // pred_check_branch
      %750 = sbr.rel (0) target = $region37
    $region36: #{tpu_custom_call.1} parent=1 // pred_region
      %s752 = ssub.s32 256, 256
      %753 = vsyncadd [#allocation4], %s752
      %s754 = sshll.u32 [#allocation8], 4
      %s755 = int_to_ptr.vmem [resolvable:$true] %s754
      %760 = dma.vmem_to_hbm [thread:$0]  %s755, 256, %s5, [#allocation4], 128, 128, 8
    $region37: #{tpu_custom_call.1} parent=1 // pred_fallthru
      _
    // Predicated region
    $region38: #{tpu_custom_call.1} parent=1 // pred_check
      _
    $region39: #{tpu_custom_call.1} parent=1 // pred_check_branch
      %762 = sbr.rel (0) target = $region41
    $region40: #{tpu_custom_call.1} parent=1 // pred_region
      %763 = dma.done [#allocation4], 256
    $region41: #{tpu_custom_call.1} parent=1 // pred_fallthru
      _
    %764 = vsyncpa [#allocation3], 1
    %765 = vsyncpa [#allocation6], 1
    %766 = vsyncpa [#allocation4], 1

</llo_original>
